<compile_context>
chip_gen: v7x
topology: tpu7x:2x2x1
jax: 0.10.0
libtpu: 0.0.40
codegen_flags: <defaults>
</compile_context>

<pallas_src>
import jax
import jax.numpy as jnp
from jax.experimental import pallas as pl
from jax.experimental.pallas import tpu as pltpu


def _bg_weight_kernel(rect_ref, x_ref, o_ref):
    """Multiply a (TB, H, W) block by the in-kernel generated 0.5/1.5 mask.

    rect_ref: SMEM (4,) int32 = [yy1, yy2, xx1, xx2] (half-open rectangle)
    x_ref, o_ref: (TB, H, W) VMEM tiles (full H, W per block -> no offsetting
    of the iota indices is needed).
    """
    yy1 = rect_ref[0]
    yy2 = rect_ref[1]
    xx1 = rect_ref[2]
    xx2 = rect_ref[3]

    shape = x_ref.shape
    row = jax.lax.broadcasted_iota(jnp.int32, shape, 1)  # h index within image
    col = jax.lax.broadcasted_iota(jnp.int32, shape, 2)  # w index within image
    inside = (row >= yy1) & (row < yy2) & (col >= xx1) & (col < xx2)

    lo = jnp.asarray(0.5, dtype=x_ref.dtype)
    hi = jnp.asarray(1.5, dtype=x_ref.dtype)
    o_ref[...] = x_ref[...] * jnp.where(inside, hi, lo)


def background_rect_bounds(H: int, W: int):
    """Rectangle bounds (yy1, yy2, xx1, xx2), scaled from the original
    480x640 canvas used in __init__ (exact match at H=480, W=640)."""
    x1, y1 = 230, 350
    x2, y2 = 412, 400
    sy, sx = H / 480.0, W / 640.0
    return int(y1 * sy), int(y2 * sy), int(x1 * sx), int(x2 * sx)


def _pick_images_per_block(n_images: int, img_bytes: int,
                           budget_bytes: int = 4 << 20) -> int:
    """Largest divisor of n_images whose block fits the per-buffer VMEM budget,
    keeping at least 2 grid steps (when possible) for v7x megacore sharding."""
    best = 1
    for d in range(1, n_images + 1):
        if n_images % d != 0:
            continue
        if d * img_bytes > budget_bytes:
            continue
        if n_images >= 2 and n_images // d < 2:
            continue
        best = d
    return best


def apply_background_weights(x: jax.Array) -> jax.Array:
    """Pallas implementation of `tensor * self.weights` (mask built in-kernel).

    x: (B, C, H, W) NCHW; returns same shape/dtype.
    """
    B, C, H, W = x.shape
    n = B * C
    x_flat = x.reshape(n, H, W)

    rect = jnp.array(background_rect_bounds(H, W), dtype=jnp.int32)

    img_bytes = H * W * jnp.dtype(x.dtype).itemsize
    tb = _pick_images_per_block(n, img_bytes)
    grid = (n // tb,)

    out_flat = pl.pallas_call(
        _bg_weight_kernel,
        out_shape=jax.ShapeDtypeStruct((n, H, W), x.dtype),
        grid_spec=pltpu.PrefetchScalarGridSpec(
            num_scalar_prefetch=1,          # rect bounds land in SMEM
            grid=grid,
            in_specs=[
                pl.BlockSpec((tb, H, W), lambda i, rect_ref: (i, 0, 0)),
            ],
            out_specs=pl.BlockSpec((tb, H, W), lambda i, rect_ref: (i, 0, 0)),
        ),
        compiler_params=pltpu.CompilerParams(
            dimension_semantics=("parallel",),
        ),
    )(rect, x_flat)

    return out_flat.reshape(B, C, H, W)


def background_backbone_forward(x: jax.Array) -> jax.Array:
    """Forward pass of background_Backbone (the defined numeric part).

    Returns the spatially re-weighted tensor that would be fed to self.body.
    TODO(synk): self.body (IntermediateLayerGetter over ResidualAttentionModel)
    is undefined in the provided source and is therefore not applied.
    """
    return apply_background_weights(x)


if __name__ == "__main__":
    key = jax.random.PRNGKey(0)
    # Small NCHW input consistent with the module's (B, 3, H, W) expectation.
    B, C, H, W = 2, 3, 48, 128
    x = jax.random.normal(key, (B, C, H, W), dtype=jnp.float32)

    out = background_backbone_forward(x)
    out = jax.block_until_ready(out)

    # Reference: plain JAX mask multiply with the same rectangle bounds.
    yy1, yy2, xx1, xx2 = background_rect_bounds(H, W)
    row = jnp.arange(H)[:, None]
    col = jnp.arange(W)[None, :]
    rect_mask = (row >= yy1) & (row < yy2) & (col >= xx1) & (col < xx2)
    weights = jnp.where(rect_mask, 1.5, 0.5).astype(jnp.float32)  # (H, W)
    ref = x * weights[None, None, :, :]

    assert out.shape == (B, C, H, W)
    assert jnp.allclose(out, ref, atol=1e-6, rtol=1e-6)

    print("KERNEL_OK")
</pallas_src>

<mosaic_0001>
module attributes {stable_mosaic.version = 11 : i64} {
  func.func @_bg_weight_kernel(%arg0: i32, %arg1: memref<4xi32, #tpu.memory_space<smem>>, %arg2: memref<3x48x128xf32, #tpu.memory_space<vmem>>, %arg3: memref<3x48x128xf32, #tpu.memory_space<vmem>>) attributes {dimension_semantics = [#tpu.dimension_semantics<parallel>], iteration_bounds = array<i64: 2>, scalar_prefetch = 1 : i64, scratch_operands = 0 : i64, tpu.core_type = #tpu.core_type<tc>, window_params = [{transform_indices = @transform_0, window_bounds = array<i64: 3, 48, 128>}, {transform_indices = @transform_1, window_bounds = array<i64: 3, 48, 128>}]} {
    %c0 = arith.constant 0 : index
    %0 = memref.load %arg1[%c0] : memref<4xi32, #tpu.memory_space<smem>>
    %c1 = arith.constant 1 : index
    %1 = memref.load %arg1[%c1] : memref<4xi32, #tpu.memory_space<smem>>
    %c2 = arith.constant 2 : index
    %2 = memref.load %arg1[%c2] : memref<4xi32, #tpu.memory_space<smem>>
    %c3 = arith.constant 3 : index
    %3 = memref.load %arg1[%c3] : memref<4xi32, #tpu.memory_space<smem>>
    %4 = tpu.iota {dimensions = array<i32: 1>} : vector<3x48x128xi32>
    %5 = tpu.iota {dimensions = array<i32: 2>} : vector<3x48x128xi32>
    %6 = vector.broadcast %0 : i32 to vector<3x48x128xi32>
    %7 = arith.cmpi sge, %4, %6 : vector<3x48x128xi32>
    %8 = vector.broadcast %1 : i32 to vector<3x48x128xi32>
    %9 = arith.cmpi slt, %4, %8 : vector<3x48x128xi32>
    %10 = arith.andi %7, %9 : vector<3x48x128xi1>
    %11 = vector.broadcast %2 : i32 to vector<3x48x128xi32>
    %12 = arith.cmpi sge, %5, %11 : vector<3x48x128xi32>
    %13 = arith.andi %10, %12 : vector<3x48x128xi1>
    %14 = vector.broadcast %3 : i32 to vector<3x48x128xi32>
    %15 = arith.cmpi slt, %5, %14 : vector<3x48x128xi32>
    %16 = arith.andi %13, %15 : vector<3x48x128xi1>
    %c0_0 = arith.constant 0 : index
    %c0_1 = arith.constant 0 : index
    %c0_2 = arith.constant 0 : index
    %17 = vector.load %arg2[%c0_0, %c0_1, %c0_2] : memref<3x48x128xf32, #tpu.memory_space<vmem>>, vector<3x48x128xf32>
    %cst = arith.constant 1.500000e+00 : f32
    %cst_3 = arith.constant 5.000000e-01 : f32
    %18 = vector.broadcast %cst : f32 to vector<3x48x128xf32>
    %19 = vector.broadcast %cst_3 : f32 to vector<3x48x128xf32>
    %20 = arith.select %16, %18, %19 : vector<3x48x128xi1>, vector<3x48x128xf32>
    %21 = arith.mulf %17, %20 : vector<3x48x128xf32>
    %c0_4 = arith.constant 0 : index
    %c0_5 = arith.constant 0 : index
    %c0_6 = arith.constant 0 : index
    %22 = vector.load %arg3[%c0_4, %c0_5, %c0_6] : memref<3x48x128xf32, #tpu.memory_space<vmem>>, vector<3x48x128xf32>
    tpu.vector_store %arg3[%c0_4, %c0_5, %c0_6], %21 {strides = array<i32>} : memref<3x48x128xf32, #tpu.memory_space<vmem>>, vector<3x48x128xf32>,
    return
  }
  func.func @transform_0(%arg0: i32, %arg1: memref<4xi32, #tpu.memory_space<smem>>) -> (i32, i32, i32) {
    %c0_i32 = arith.constant 0 : i32
    %c0_i32_0 = arith.constant 0 : i32
    %c0_i32_1 = arith.constant 0 : i32
    return %arg0, %c0_i32, %c0_i32_0 : i32, i32, i32
  }
  func.func @transform_1(%arg0: i32, %arg1: memref<4xi32, #tpu.memory_space<smem>>) -> (i32, i32, i32) {
    %c0_i32 = arith.constant 0 : i32
    %c0_i32_0 = arith.constant 0 : i32
    %c0_i32_1 = arith.constant 0 : i32
    return %arg0, %c0_i32, %c0_i32_0 : i32, i32, i32
  }
}

</mosaic_0001>

<llo_original>
// kernel: tpu_custom_call.1
$region0: #{tpu_custom_call.1}
  #allocation0 [shape = 'u32[]', space=smem, size = 0x4, offset = 0x4, fixed_abs, tag = 'smem constant byte address 0x4 - core index']
  #allocation1 [shape = 'u32[144,128]{1,0:T(1,128)}', space=vmem, size = 0x12000, scoped, tag = 'internal scratch']
  #allocation2 [shape = 's32[1]{0}', space=sflag, size = 0x4, scoped, tag = 'scoped memory for tpu_custom_call.1']
  #allocation3 [shape = 'u8[512]{0}', space=smem, size = 0x200, scoped, tag = 'prefetched SMEM operand 0']
  %s0 = inlined_call_operand.hbm [shape: s32[4], index: 0, kind: input, shape index: {}]
  %s1 = inlined_call_operand.hbm [shape: f32[6,48,128], index: 1, kind: input, shape index: {}]
  %s2 = inlined_call_operand.hbm [shape: f32[6,48,128], index: 2, kind: output, shape index: {}]
  %s3 = sld [smem:[#allocation0]]
  $region41: #{tpu_custom_call.1} parent=0
    _
  %s5 = ssub.s32 1, %s3
  %s6 = scalar_select 0, %s5, %s3
  %8 = dma.hbm_to_smem %s0, 16, [#allocation3], [#allocation2]
  %9 = dma.done [#allocation2], 16
  %10 = sfence
  $region1: #{tpu_custom_call.1} parent=0
    #allocation4 [shape = 'u8[147456]{0}', space=vmem, size = 0x24000, scoped, tag = 'input window, operand 1']
    #allocation5 [shape = 's32[2]{0}', space=sflag, size = 0x8, scoped, tag = 'scoped memory for tpu_custom_call.1']
    #allocation6 [shape = 's32[2]{0}', space=sflag, size = 0x8, scoped, tag = 'scoped memory for tpu_custom_call.1']
    #allocation7 [shape = 'u8[147456]{0}', space=vmem, size = 0x24000, scoped, tag = 'output window, operand 0']
    %11 = vsyncpa [#allocation5], 0
    %s12 = scalar_lea.sflag [#allocation5], 1
    %13 = vsyncpa %s12, 0
    %14 = vsyncpa [#allocation6], 0
    %s15 = scalar_lea.sflag [#allocation6], 1
    %16 = vsyncpa %s15, 0
    loop: start=0, step=1, limit=4
    $region2: #{tpu_custom_call.1} parent=1 // loop_pre_header
      _
    $region3: #{tpu_custom_call.1} parent=1 // loop_header
      %s18 = sphi 0, %s22
      %p19 = scmp.ge.s32.totalorder %s18, 4
      %s28 = sphi 0, %s30
      %s31 = sphi 0, %s28
      %s32 = sphi 0, %s31
      %s48 = sphi 0, %s32
      %s54 = sphi 0, %s56
      %s57 = sphi 0, %s54
      %s58 = sphi 0, %s57
      %s74 = sphi 0, %s58
    $region4: #{tpu_custom_call.1} parent=1 // loop_header_branch
      %21 = sbr.rel (%p19) target = $region8
    $region5: #{tpu_custom_call.1} parent=1 // loop_body
      %s23 = ssub.s32 %s18, 1
      %s24 = ssub.s32 %s18, 2
      %s25 = sadd.s32 %s18, 1
      %s26 = ssub.s32 %s18, %s25
      %p27 = scmp.eq.s32.totalorder %s26, 0
      %s29 = sadd.s32 %s28, 1
      %s30 = scalar_select %p27, %s28, %s29
      %p33 = pneg %p27
      %p34 = scmp.eq.s32.totalorder %s18, 1
      %p35 = por %p33, %p34
      %p36 = scmp.ne.s32.totalorder %s28, %s31
      %p37 = scmp.eq.s32.totalorder %s18, 0
      %p38 = por %p36, %p37
      %p39 = scmp.ne.s32.totalorder %s28, %s31
      %p40 = scmp.eq.s32.totalorder %s23, 1
      %p41 = por %p39, %p40
      %p42 = scmp.ne.s32.totalorder %s31, %s32
      %p43 = scmp.eq.s32.totalorder %s23, 0
      %p44 = por %p42, %p43
      %p45 = scmp.ne.s32.totalorder %s31, %s32
      %p46 = scmp.eq.s32.totalorder %s24, 1
      %p47 = por %p45, %p46
      %p49 = scmp.ne.s32.totalorder %s32, %s48
      %p50 = scmp.eq.s32.totalorder %s24, 0
      %p51 = por %p49, %p50
      %s52 = ssub.s32 %s18, %s25
      %p53 = scmp.eq.s32.totalorder %s52, 0
      %s55 = sadd.s32 %s54, 1
      %s56 = scalar_select %p53, %s54, %s55
      %p59 = pneg %p53
      %p60 = scmp.eq.s32.totalorder %s18, 1
      %p61 = por %p59, %p60
      %p62 = scmp.ne.s32.totalorder %s54, %s57
      %p63 = scmp.eq.s32.totalorder %s18, 0
      %p64 = por %p62, %p63
      %p65 = scmp.ne.s32.totalorder %s54, %s57
      %p66 = scmp.eq.s32.totalorder %s23, 1
      %p67 = por %p65, %p66
      %p68 = scmp.ne.s32.totalorder %s57, %s58
      %p69 = scmp.eq.s32.totalorder %s23, 0
      %p70 = por %p68, %p69
      %p71 = scmp.ne.s32.totalorder %s57, %s58
      %p72 = scmp.eq.s32.totalorder %s24, 1
      %p73 = por %p71, %p72
      %p75 = scmp.ne.s32.totalorder %s58, %s74
      %p76 = scmp.eq.s32.totalorder %s24, 0
      %p77 = por %p75, %p76
      %p78 = scmp.le.s32.totalorder 1, %s18
      %p79 = scmp.lt.s32.totalorder %s18, 3
      %p80 = pnand %p78, %p79
      %p81 = pneg %p80
      // Predicated region
      $region9: #{tpu_custom_call.1} parent=5 // pred_check
        _
      $region10: #{tpu_custom_call.1} parent=5 // pred_check_branch
        %83 = sbr.rel (%p80) target = $region12
      $region11: #{tpu_custom_call.1} parent=5 // pred_region
        %s84 = ssub.s32 %s18, 1
      $region12: #{tpu_custom_call.1} parent=5 // pred_fallthru
        _
      %p85 = scmp.lt.s32.totalorder %s18, 2
      // Predicated region
      $region13: #{tpu_custom_call.1} parent=5 // pred_check
        %p86 = pneg %p85
      $region14: #{tpu_custom_call.1} parent=5 // pred_check_branch
        %88 = sbr.rel (%p86) target = $region16
      $region15: #{tpu_custom_call.1} parent=5 // pred_region
        // Predicated region
        $region17: #{tpu_custom_call.1} parent=15 // pred_check
          %p89 = pneg %p38
        $region18: #{tpu_custom_call.1} parent=15 // pred_check_branch
          %91 = sbr.rel (%p89) target = $region20
        $region19: #{tpu_custom_call.1} parent=15 // pred_region
          %s92 = sand.u32 %s28, 1
          %s93 = scalar_lea.sflag [#allocation5], %s92
          %s94 = sand.u32 %s28, 1
          %s95 = smul.addr %s94, 144
          %s96 = scalar_lea.vmem [#allocation4], %s95
          %s97 = smul.u32 3, %s18
          %s99 = ssub.s32 2304, 2304
          %100 = vsyncadd %s93, %s99
          %s101 = smul.addr %s97, 6
          %s102 = smul.addr %s101, 128
          %s103 = scalar_lea.hbm %s1, %s102
          %s104 = sshll.u32 %s96, 4
          %s105 = int_to_ptr.vmem [resolvable:$true] %s104
          %110 = dma.hbm_to_vmem [thread:$0]  %s103, 2304, %s105, %s93, 128, 128, 8
        $region20: #{tpu_custom_call.1} parent=15 // pred_fallthru
          _
      $region16: #{tpu_custom_call.1} parent=5 // pred_fallthru
        _
      %p111 = scmp.le.s32.totalorder 1, %s18
      %p112 = scmp.lt.s32.totalorder %s18, 3
      %p113 = pnand %p111, %p112
      %p114 = pneg %p113
      // Predicated region
      $region21: #{tpu_custom_call.1} parent=5 // pred_check
        _
      $region22: #{tpu_custom_call.1} parent=5 // pred_check_branch
        %116 = sbr.rel (%p113) target = $region24
      $region23: #{tpu_custom_call.1} parent=5 // pred_region
        %s117 = ssub.s32 %s18, 1
        %s118 = sand.u32 %s31, 1
        %s119 = scalar_lea.sflag [#allocation5], %s118
        %s120 = sand.u32 %s31, 1
        %s121 = smul.addr %s120, 144
        %s122 = scalar_lea.vmem [#allocation4], %s121
        // Predicated region
        $region25: #{tpu_custom_call.1} parent=23 // pred_check
          %p123 = pneg %p44
        $region26: #{tpu_custom_call.1} parent=23 // pred_check_branch
          %125 = sbr.rel (%p123) target = $region28
        $region27: #{tpu_custom_call.1} parent=23 // pred_region
          %126 = dma.done %s119, 2304
        $region28: #{tpu_custom_call.1} parent=23 // pred_fallthru
          _
        %s127 = sand.u32 %s31, 1
        %s128 = scalar_lea.sflag [#allocation5], %s127
        %s129 = sand.u32 %s31, 1
        %s130 = smul.addr %s129, 144
        %s131 = scalar_lea.vmem [#allocation4], %s130
        %p132 = pneg %p44
        %p133 = pneg %p41
        %p134 = pneg %p70
        %p135 = pneg %p67
        %s136 = sand.u32 %s57, 1
        %s137 = scalar_lea.sflag [#allocation6], %s136
        %s138 = sand.u32 %s57, 1
        %s139 = smul.addr %s138, 144
        %s140 = scalar_lea.vmem [#allocation7], %s139
        %s141 = smul.u32 3, %s23
        %s142 = smul.u32 3, %s23
        %s143 = sld [smem:[#allocation3]]
        %s144 = sld [smem:[#allocation3 + $0x1]]
        %s145 = sld [smem:[#allocation3 + $0x2]]
        %s146 = sld [smem:[#allocation3 + $0x3]]
        %v147 = vlaneseq
        %v148 = vshrl.u32 %v147, 7
        %v149 = vadd.s32 %v148, 8
        %v150 = vadd.s32 %v148, 16
        %v151 = vadd.s32 %v148, 24
        %v152 = vadd.s32 %v148, 32
        %v153 = vadd.s32 %v148, 40
        %v154 = vlaneseq
        %v155 = vand.u32 %v154, 127
        %v156 = vstv %s143
        %vm157 = vcmp.ge.s32.totalorder %v148, %v156
        %vm158 = vcmp.ge.s32.totalorder %v149, %v156
        %vm159 = vcmp.ge.s32.totalorder %v150, %v156
        %vm160 = vcmp.ge.s32.totalorder %v151, %v156
        %vm161 = vcmp.ge.s32.totalorder %v152, %v156
        %vm162 = vcmp.ge.s32.totalorder %v153, %v156
        %v163 = vstv %s144
        %vm164 = vcmp.lt.s32.totalorder %v148, %v163
        %vm165 = vcmp.lt.s32.totalorder %v149, %v163
        %vm166 = vcmp.lt.s32.totalorder %v150, %v163
        %vm167 = vcmp.lt.s32.totalorder %v151, %v163
        %vm168 = vcmp.lt.s32.totalorder %v152, %v163
        %vm169 = vcmp.lt.s32.totalorder %v153, %v163
        %vm170 = vmand %vm157, %vm164
        %vm171 = vmand %vm158, %vm165
        %vm172 = vmand %vm159, %vm166
        %vm173 = vmand %vm160, %vm167
        %vm174 = vmand %vm161, %vm168
        %vm175 = vmand %vm162, %vm169
        %v176 = vstv %s145
        %vm177 = vcmp.ge.s32.totalorder %v155, %v176
        %vm178 = vmand %vm170, %vm177
        %vm179 = vmand %vm171, %vm177
        %vm180 = vmand %vm172, %vm177
        %vm181 = vmand %vm173, %vm177
        %vm182 = vmand %vm174, %vm177
        %vm183 = vmand %vm175, %vm177
        %v184 = vstv %s146
        %vm185 = vcmp.lt.s32.totalorder %v155, %v184
        %vm186 = vmand %vm178, %vm185
        %vm187 = vmand %vm179, %vm185
        %vm188 = vmand %vm180, %vm185
        %vm189 = vmand %vm181, %vm185
        %vm190 = vmand %vm182, %vm185
        %vm191 = vmand %vm183, %vm185
        %v192 = vld [vmem:[%s122] sm:$0xff]
        %v193 = vld [vmem:[%s122 + $0x8] sm:$0xff]
        %v194 = vld [vmem:[%s122 + $0x10] sm:$0xff]
        %v195 = vld [vmem:[%s122 + $0x18] sm:$0xff]
        %v196 = vld [vmem:[%s122 + $0x20] sm:$0xff]
        %v197 = vld [vmem:[%s122 + $0x28] sm:$0xff]
        %v198 = vld [vmem:[%s122 + $0x30] sm:$0xff]
        %v199 = vld [vmem:[%s122 + $0x38] sm:$0xff]
        %v200 = vld [vmem:[%s122 + $0x40] sm:$0xff]
        %v201 = vld [vmem:[%s122 + $0x48] sm:$0xff]
        %v202 = vld [vmem:[%s122 + $0x50] sm:$0xff]
        %v203 = vld [vmem:[%s122 + $0x58] sm:$0xff]
        %v204 = vld [vmem:[%s122 + $0x60] sm:$0xff]
        %v205 = vld [vmem:[%s122 + $0x68] sm:$0xff]
        %v206 = vld [vmem:[%s122 + $0x70] sm:$0xff]
        %v207 = vld [vmem:[%s122 + $0x78] sm:$0xff]
        %v208 = vld [vmem:[%s122 + $0x80] sm:$0xff]
        %v209 = vld [vmem:[%s122 + $0x88] sm:$0xff]
        %v210 = vsel %vm186, 1.5, 0.5
        %v211 = vsel %vm187, 1.5, 0.5
        %v212 = vsel %vm188, 1.5, 0.5
        %v213 = vsel %vm189, 1.5, 0.5
        %v214 = vsel %vm190, 1.5, 0.5
        %v215 = vsel %vm191, 1.5, 0.5
        %v216 = vmul.f32 %v192, %v210
        %v217 = vmul.f32 %v193, %v211
        %v218 = vmul.f32 %v194, %v212
        %v219 = vmul.f32 %v195, %v213
        %v220 = vmul.f32 %v196, %v214
        %v221 = vmul.f32 %v197, %v215
        %v222 = vmul.f32 %v198, %v210
        %v223 = vmul.f32 %v199, %v211
        %v224 = vmul.f32 %v200, %v212
        %v225 = vmul.f32 %v201, %v213
        %v226 = vmul.f32 %v202, %v214
        %v227 = vmul.f32 %v203, %v215
        %v228 = vmul.f32 %v204, %v210
        %v229 = vmul.f32 %v205, %v211
        %v230 = vmul.f32 %v206, %v212
        %v231 = vmul.f32 %v207, %v213
        %v232 = vmul.f32 %v208, %v214
        %v233 = vmul.f32 %v209, %v215
        %234 = vst [vmem:[%s140] sm:$0xff] %v216
        %235 = vst [vmem:[%s140 + $0x8] sm:$0xff] %v217
        %236 = vst [vmem:[%s140 + $0x10] sm:$0xff] %v218
        %237 = vst [vmem:[%s140 + $0x18] sm:$0xff] %v219
        %238 = vst [vmem:[%s140 + $0x20] sm:$0xff] %v220
        %239 = vst [vmem:[%s140 + $0x28] sm:$0xff] %v221
        %240 = vst [vmem:[%s140 + $0x30] sm:$0xff] %v222
        %241 = vst [vmem:[%s140 + $0x38] sm:$0xff] %v223
        %242 = vst [vmem:[%s140 + $0x40] sm:$0xff] %v224
        %243 = vst [vmem:[%s140 + $0x48] sm:$0xff] %v225
        %244 = vst [vmem:[%s140 + $0x50] sm:$0xff] %v226
        %245 = vst [vmem:[%s140 + $0x58] sm:$0xff] %v227
        %246 = vst [vmem:[%s140 + $0x60] sm:$0xff] %v228
        %247 = vst [vmem:[%s140 + $0x68] sm:$0xff] %v229
        %248 = vst [vmem:[%s140 + $0x70] sm:$0xff] %v230
        %249 = vst [vmem:[%s140 + $0x78] sm:$0xff] %v231
        %250 = vst [vmem:[%s140 + $0x80] sm:$0xff] %v232
        %251 = vst [vmem:[%s140 + $0x88] sm:$0xff] %v233
        %s252 = sand.u32 %s57, 1
        %s253 = scalar_lea.sflag [#allocation6], %s252
        %s254 = sand.u32 %s57, 1
        %s255 = smul.addr %s254, 144
        %s256 = scalar_lea.vmem [#allocation7], %s255
        // Predicated region
        $region29: #{tpu_custom_call.1} parent=23 // pred_check
          %p257 = pneg %p67
        $region30: #{tpu_custom_call.1} parent=23 // pred_check_branch
          %259 = sbr.rel (%p257) target = $region32
        $region31: #{tpu_custom_call.1} parent=23 // pred_region
          %s260 = smul.u32 3, %s23
          %s262 = ssub.s32 2304, 2304
          %263 = vsyncadd %s253, %s262
          %s264 = smul.addr %s260, 6
          %s265 = smul.addr %s264, 128
          %s266 = scalar_lea.hbm %s2, %s265
          %s267 = sshll.u32 %s256, 4
          %s268 = int_to_ptr.vmem [resolvable:$true] %s267
          %273 = dma.vmem_to_hbm [thread:$0]  %s268, 2304, %s266, %s253, 128, 128, 8
        $region32: #{tpu_custom_call.1} parent=23 // pred_fallthru
          _
      $region24: #{tpu_custom_call.1} parent=5 // pred_fallthru
        _
      %p274 = scmp.le.s32.totalorder 2, %s18
      // Predicated region
      $region33: #{tpu_custom_call.1} parent=5 // pred_check
        %p275 = pneg %p274
      $region34: #{tpu_custom_call.1} parent=5 // pred_check_branch
        %277 = sbr.rel (%p275) target = $region36
      $region35: #{tpu_custom_call.1} parent=5 // pred_region
        %s278 = ssub.s32 %s18, 2
        // Predicated region
        $region37: #{tpu_custom_call.1} parent=35 // pred_check
          %p279 = pneg %p73
        $region38: #{tpu_custom_call.1} parent=35 // pred_check_branch
          %281 = sbr.rel (%p279) target = $region40
        $region39: #{tpu_custom_call.1} parent=35 // pred_region
          %s282 = sand.u32 %s58, 1
          %s283 = scalar_lea.sflag [#allocation6], %s282
          %s284 = sand.u32 %s58, 1
          %s285 = smul.addr %s284, 144
          %s286 = scalar_lea.vmem [#allocation7], %s285
          %287 = dma.done %s283, 2304
        $region40: #{tpu_custom_call.1} parent=35 // pred_fallthru
          _
      $region36: #{tpu_custom_call.1} parent=5 // pred_fallthru
        _
    $region6: #{tpu_custom_call.1} parent=1 // loop_footer
      %s22 = sadd.s32 1, %s18
    $region7: #{tpu_custom_call.1} parent=1 // loop_footer_branch
      %17 = sbr.rel target = $region3
    $region8: #{tpu_custom_call.1} parent=1 // loop_exit
      _
    %288 = vsyncpa [#allocation5], 1
    %s289 = scalar_lea.sflag [#allocation5], 1
    %290 = vsyncpa %s289, 1
    %291 = vsyncpa [#allocation6], 1
    %s292 = scalar_lea.sflag [#allocation6], 1
    %293 = vsyncpa %s292, 1

</llo_original>
